<compile_context>
chip_gen: v6e
topology: v6e:2x2x1
jax: 0.10.0
libtpu: 0.0.40
codegen_flags: <defaults>
</compile_context>

<pallas_src>
import functools

import jax
import jax.numpy as jnp
from jax import lax
from jax.experimental import pallas as pl
from jax.experimental.pallas import tpu as pltpu

LANE = 128
BLOCK_ROWS = 1024  # ~0.5 MiB per f32 input block; VMEM-safe on v5e/v6e/v7x.


# ---------------------------------------------------------------------------
# Generic Pallas reduction kernel: mean over all elements of elem_fn(*inputs).
# ---------------------------------------------------------------------------
def _mean_kernel(*refs, elem_fn, n_valid, block_rows, masked):
    *in_refs, out_ref, acc_ref = refs
    i = pl.program_id(0)

    @pl.when(i == 0)
    def _():
        acc_ref[...] = jnp.zeros_like(acc_ref)

    vals = [r[...].astype(jnp.float32) for r in in_refs]
    contrib = elem_fn(*vals)  # (block_rows, 128) f32, pure VPU work

    if masked:
        # Mask out zero-padded lanes / out-of-bounds rows of the last block.
        row = lax.broadcasted_iota(jnp.int32, contrib.shape, 0) + i * block_rows
        col = lax.broadcasted_iota(jnp.int32, contrib.shape, 1)
        flat_idx = row * LANE + col
        contrib = jnp.where(flat_idx < n_valid, contrib, jnp.float32(0.0))

    acc_ref[...] += contrib  # vreg-shaped accumulator, no per-step XLU reduction

    @pl.when(i == pl.num_programs(0) - 1)
    def _():
        col_sum = jnp.sum(acc_ref[...], axis=0, keepdims=True)   # (1, 128)
        total = jnp.sum(col_sum, axis=1, keepdims=True)          # (1, 1)
        out_ref[...] = total * jnp.float32(1.0 / n_valid)


def _pallas_mean(elem_fn, *arrays):
    """mean(elem_fn(*arrays)) over all elements, via a Pallas TPU kernel."""
    n = arrays[0].size
    rows = pl.cdiv(n, LANE)
    padded = rows * LANE

    slabs = []
    for a in arrays:
        flat = a.reshape(-1)  # native dtype; cast happens inside the kernel
        if padded != n:
            # Only hit when element count is not a multiple of 128 (never for
            # typical NCHW image tensors) and pads < 128 elements.
            flat = jnp.pad(flat, (0, padded - n))
        slabs.append(flat.reshape(rows, LANE))

    br = rows if rows <= BLOCK_ROWS else BLOCK_ROWS  # full-dim or multiple of 8
    grid = (pl.cdiv(rows, br),)
    masked = (padded != n) or (rows % br != 0)

    kernel = functools.partial(
        _mean_kernel,
        elem_fn=elem_fn,
        n_valid=int(n),
        block_rows=br,
        masked=masked,
    )

    out = pl.pallas_call(
        kernel,
        out_shape=jax.ShapeDtypeStruct((1, 1), jnp.float32),
        grid_spec=pltpu.PrefetchScalarGridSpec(
            num_scalar_prefetch=0,
            grid=grid,
            in_specs=[pl.BlockSpec((br, LANE), lambda i: (i, 0)) for _ in slabs],
            out_specs=pl.BlockSpec((1, 1), lambda i: (0, 0)),
            scratch_shapes=[pltpu.VMEM((br, LANE), jnp.float32)],
        ),
        compiler_params=pltpu.CompilerParams(
            dimension_semantics=("arbitrary",),
        ),
    )(*slabs)
    return out[0, 0]


# ---------------------------------------------------------------------------
# Elementwise functions fed to the reduction kernel.
# ---------------------------------------------------------------------------
def _weighted_l1_l2(w1, w2):
    def fn(x, y):
        d = x - y
        return w1 * jnp.abs(d) + w2 * (d * d)
    return fn


def _ssim_elem(mu1, mu2, c11, c22, c12):
    c1 = 0.01 ** 2
    c2 = 0.03 ** 2
    mu1_sq = mu1 * mu1
    mu2_sq = mu2 * mu2
    mu12 = mu1 * mu2
    s11 = c11 - mu1_sq
    s22 = c22 - mu2_sq
    s12 = c12 - mu12
    num = (2.0 * mu12 + c1) * (2.0 * s12 + c2)
    den = (mu1_sq + mu2_sq + c1) * (s11 + s22 + c2)
    return num / den


# ---------------------------------------------------------------------------
# XLA-side helpers for the SSIM window statistics and the gradient stencil.
# ---------------------------------------------------------------------------
def _gaussian_1d(window_size=11, sigma=1.5):
    x = jnp.arange(window_size, dtype=jnp.float32)
    g = jnp.exp(-((x - window_size // 2) ** 2) / (2.0 * sigma ** 2))
    return g / jnp.sum(g)


def _conv_matrix(size, window_size=11, sigma=1.5):
    """Banded matrix A with A[i,k] = g[k-i+half] (zero-padded 1D gaussian conv)."""
    g = _gaussian_1d(window_size, sigma)
    half = window_size // 2
    i = jnp.arange(size)[:, None]
    k = jnp.arange(size)[None, :]
    d = k - i + half
    valid = (d >= 0) & (d < window_size)
    return jnp.where(valid, g[jnp.clip(d, 0, window_size - 1)], 0.0)


def _gauss_blur(x, a_h, a_w):
    # TODO(synk): SSIM's 11x11 Gaussian depthwise conv is done as a separable
    # XLA einsum rather than a dedicated Pallas conv kernel.
    return jnp.einsum("ik,bckl,jl->bcij", a_h, x, a_w)


def _spatial_gradient(x):
    """GetGradientNopadding: sqrt(conv_v^2 + conv_h^2 + 1e-6), zero padding."""
    x = x.astype(jnp.float32)
    xp = jnp.pad(x, ((0, 0), (0, 0), (1, 1), (1, 1)))
    v = xp[:, :, 2:, 1:-1] - xp[:, :, :-2, 1:-1]   # x[i+1,j] - x[i-1,j]
    h = xp[:, :, 1:-1, 2:] - xp[:, :, 1:-1, :-2]   # x[i,j+1] - x[i,j-1]
    return jnp.sqrt(v * v + h * h + 1e-6)


# ---------------------------------------------------------------------------
# LossFunction.forward
# ---------------------------------------------------------------------------
def loss_function(enh, label, window_size=11, sigma=1.5):
    assert enh.shape == label.shape, "enh and label must have identical shapes"

    # MyLoss = 0.8 * L1 + 0.2 * MSE   (single fused Pallas reduction)
    my_loss = _pallas_mean(_weighted_l1_l2(0.8, 0.2), enh, label)

    # SSIM loss
    _, _, h, w = enh.shape
    a_h = _conv_matrix(h, window_size, sigma)
    a_w = _conv_matrix(w, window_size, sigma)
    e32 = enh.astype(jnp.float32)
    l32 = label.astype(jnp.float32)
    mu1 = _gauss_blur(e32, a_h, a_w)
    mu2 = _gauss_blur(l32, a_h, a_w)
    c11 = _gauss_blur(e32 * e32, a_h, a_w)
    c22 = _gauss_blur(l32 * l32, a_h, a_w)
    c12 = _gauss_blur(e32 * l32, a_h, a_w)
    ssim_mean = _pallas_mean(_ssim_elem, mu1, mu2, c11, c22, c12)
    ssim_loss = 0.3 * (1.0 - ssim_mean)

    # Gradient loss = 0.1 * L1(grad(enh), grad(label))
    grad_e = _spatial_gradient(enh)
    grad_l = _spatial_gradient(label)
    grad_loss = 0.1 * _pallas_mean(_weighted_l1_l2(1.0, 0.0), grad_e, grad_l)

    total = my_loss + ssim_loss + grad_loss
    return total, my_loss, ssim_loss, grad_loss


# ---------------------------------------------------------------------------
# Pure-JAX reference (no Pallas) for verification.
# ---------------------------------------------------------------------------
def loss_function_reference(enh, label, window_size=11, sigma=1.5):
    enh = enh.astype(jnp.float32)
    label = label.astype(jnp.float32)
    d = enh - label
    my_loss = 0.8 * jnp.mean(jnp.abs(d)) + 0.2 * jnp.mean(d * d)

    _, _, h, w = enh.shape
    a_h = _conv_matrix(h, window_size, sigma)
    a_w = _conv_matrix(w, window_size, sigma)
    mu1 = _gauss_blur(enh, a_h, a_w)
    mu2 = _gauss_blur(label, a_h, a_w)
    c11 = _gauss_blur(enh * enh, a_h, a_w)
    c22 = _gauss_blur(label * label, a_h, a_w)
    c12 = _gauss_blur(enh * label, a_h, a_w)
    ssim_map = _ssim_elem(mu1, mu2, c11, c22, c12)
    ssim_loss = 0.3 * (1.0 - jnp.mean(ssim_map))

    grad_e = _spatial_gradient(enh)
    grad_l = _spatial_gradient(label)
    grad_loss = 0.1 * jnp.mean(jnp.abs(grad_e - grad_l))

    total = my_loss + ssim_loss + grad_loss
    return total, my_loss, ssim_loss, grad_loss


if __name__ == "__main__":
    key = jax.random.PRNGKey(0)
    kx, ky = jax.random.split(key)
    # Image-like NCHW tensors in [0, 1], consistent with the module's usage.
    enh = jax.random.uniform(kx, (2, 4, 16, 16), dtype=jnp.float32)
    label = jax.random.uniform(ky, (2, 4, 16, 16), dtype=jnp.float32)

    total, my_l, ssim_l, grad_l = jax.jit(loss_function)(enh, label)
    jax.block_until_ready(total)

    ref_total, ref_my, ref_ssim, ref_grad = loss_function_reference(enh, label)
    for got, ref in ((total, ref_total), (my_l, ref_my),
                     (ssim_l, ref_ssim), (grad_l, ref_grad)):
        assert jnp.allclose(got, ref, rtol=1e-5, atol=1e-5), (got, ref)

    print("KERNEL_OK")
</pallas_src>

<mosaic_0001>
module attributes {stable_mosaic.version = 11 : i64} {
  func.func @_mean_kernel(%arg0: i32, %arg1: memref<16x128xf32, #tpu.memory_space<vmem>>, %arg2: memref<16x128xf32, #tpu.memory_space<vmem>>, %arg3: memref<1x1xf32, #tpu.memory_space<vmem>>, %arg4: memref<16x128xf32, #tpu.memory_space<vmem>>) attributes {dimension_semantics = [#tpu.dimension_semantics<arbitrary>], iteration_bounds = array<i64: 1>, scalar_prefetch = 0 : i64, scratch_operands = 1 : i64, tpu.core_type = #tpu.core_type<tc>, window_params = [{transform_indices = @transform_0, window_bounds = array<i64: 16, 128>}, {transform_indices = @transform_1, window_bounds = array<i64: 16, 128>}, {pipeline_mode = #tpu.pipeline_mode<synchronous>, transform_indices = @transform_2, window_bounds = array<i64: 1, 1>}]} {
    %c0_i32 = arith.constant 0 : i32
    %0 = arith.cmpi eq, %arg0, %c0_i32 : i32
    %1 = arith.extui %0 : i1 to i32
    %c0_i32_0 = arith.constant 0 : i32
    %2 = arith.cmpi ne, %1, %c0_i32_0 : i32
    scf.if %2 {
      %cst_11 = arith.constant 0.000000e+00 : f32
      %19 = vector.broadcast %cst_11 : f32 to vector<16x128xf32>
      %c0_12 = arith.constant 0 : index
      %c0_13 = arith.constant 0 : index
      %20 = vector.load %arg4[%c0_12, %c0_13] : memref<16x128xf32, #tpu.memory_space<vmem>>, vector<16x128xf32>
      tpu.vector_store %arg4[%c0_12, %c0_13], %19 {strides = array<i32>} : memref<16x128xf32, #tpu.memory_space<vmem>>, vector<16x128xf32>,
    } else {
    }
    %c0 = arith.constant 0 : index
    %c0_1 = arith.constant 0 : index
    %3 = vector.load %arg1[%c0, %c0_1] : memref<16x128xf32, #tpu.memory_space<vmem>>, vector<16x128xf32>
    %c0_2 = arith.constant 0 : index
    %c0_3 = arith.constant 0 : index
    %4 = vector.load %arg2[%c0_2, %c0_3] : memref<16x128xf32, #tpu.memory_space<vmem>>, vector<16x128xf32>
    %5 = arith.subf %3, %4 : vector<16x128xf32>
    %6 = math.absf %5 : vector<16x128xf32>
    %cst = arith.constant 8.000000e-01 : f32
    %7 = vector.broadcast %cst : f32 to vector<16x128xf32>
    %8 = arith.mulf %7, %6 : vector<16x128xf32>
    %9 = arith.mulf %5, %5 : vector<16x128xf32>
    %cst_4 = arith.constant 2.000000e-01 : f32
    %10 = vector.broadcast %cst_4 : f32 to vector<16x128xf32>
    %11 = arith.mulf %10, %9 : vector<16x128xf32>
    %12 = arith.addf %8, %11 : vector<16x128xf32>
    %c0_5 = arith.constant 0 : index
    %c0_6 = arith.constant 0 : index
    %13 = vector.load %arg4[%c0_5, %c0_6] : memref<16x128xf32, #tpu.memory_space<vmem>>, vector<16x128xf32>
    %14 = arith.addf %13, %12 : vector<16x128xf32>
    %c0_7 = arith.constant 0 : index
    %c0_8 = arith.constant 0 : index
    %15 = vector.load %arg4[%c0_7, %c0_8] : memref<16x128xf32, #tpu.memory_space<vmem>>, vector<16x128xf32>
    tpu.vector_store %arg4[%c0_7, %c0_8], %14 {strides = array<i32>} : memref<16x128xf32, #tpu.memory_space<vmem>>, vector<16x128xf32>,
    %c0_i32_9 = arith.constant 0 : i32
    %16 = arith.cmpi eq, %arg0, %c0_i32_9 : i32
    %17 = arith.extui %16 : i1 to i32
    %c0_i32_10 = arith.constant 0 : i32
    %18 = arith.cmpi ne, %17, %c0_i32_10 : i32
    scf.if %18 {
      %c0_11 = arith.constant 0 : index
      %c0_12 = arith.constant 0 : index
      %19 = vector.load %arg4[%c0_11, %c0_12] : memref<16x128xf32, #tpu.memory_space<vmem>>, vector<16x128xf32>
      %cst_13 = arith.constant dense<0.000000e+00> : vector<128xf32>
      %20 = vector.multi_reduction <add>, %19, %cst_13 [0] : vector<16x128xf32> to vector<128xf32>
      %21 = vector.shape_cast %20 : vector<128xf32> to vector<1x128xf32>
      %cst_14 = arith.constant dense<0.000000e+00> : vector<1xf32>
      %22 = vector.multi_reduction <add>, %21, %cst_14 [1] : vector<1x128xf32> to vector<1xf32>
      %23 = vector.shape_cast %22 : vector<1xf32> to vector<1x1xf32>
      %cst_15 = arith.constant 4.8828125E-4 : f32
      %24 = vector.broadcast %cst_15 : f32 to vector<1x1xf32>
      %25 = arith.mulf %23, %24 : vector<1x1xf32>
      %c0_16 = arith.constant 0 : index
      %c0_17 = arith.constant 0 : index
      %26 = vector.load %arg3[%c0_16, %c0_17] : memref<1x1xf32, #tpu.memory_space<vmem>>, vector<1x1xf32>
      tpu.vector_store %arg3[%c0_16, %c0_17], %25 {strides = array<i32>} : memref<1x1xf32, #tpu.memory_space<vmem>>, vector<1x1xf32>,
    } else {
    }
    return
  }
  func.func @transform_0(%arg0: i32) -> (i32, i32) {
    %c0_i32 = arith.constant 0 : i32
    %c0_i32_0 = arith.constant 0 : i32
    return %arg0, %c0_i32 : i32, i32
  }
  func.func @transform_1(%arg0: i32) -> (i32, i32) {
    %c0_i32 = arith.constant 0 : i32
    %c0_i32_0 = arith.constant 0 : i32
    return %arg0, %c0_i32 : i32, i32
  }
  func.func @transform_2(%arg0: i32) -> (i32, i32) {
    %c0_i32 = arith.constant 0 : i32
    %c0_i32_0 = arith.constant 0 : i32
    %c0_i32_1 = arith.constant 0 : i32
    return %c0_i32, %c0_i32_0 : i32, i32
  }
}

module attributes {stable_mosaic.version = 11 : i64} {
  func.func @_mean_kernel(%arg0: i32, %arg1: memref<16x128xf32, #tpu.memory_space<vmem>>, %arg2: memref<16x128xf32, #tpu.memory_space<vmem>>, %arg3: memref<16x128xf32, #tpu.memory_space<vmem>>, %arg4: memref<16x128xf32, #tpu.memory_space<vmem>>, %arg5: memref<16x128xf32, #tpu.memory_space<vmem>>, %arg6: memref<1x1xf32, #tpu.memory_space<vmem>>, %arg7: memref<16x128xf32, #tpu.memory_space<vmem>>) attributes {dimension_semantics = [#tpu.dimension_semantics<arbitrary>], iteration_bounds = array<i64: 1>, scalar_prefetch = 0 : i64, scratch_operands = 1 : i64, tpu.core_type = #tpu.core_type<tc>, window_params = [{transform_indices = @transform_0, window_bounds = array<i64: 16, 128>}, {transform_indices = @transform_1, window_bounds = array<i64: 16, 128>}, {transform_indices = @transform_2, window_bounds = array<i64: 16, 128>}, {transform_indices = @transform_3, window_bounds = array<i64: 16, 128>}, {transform_indices = @transform_4, window_bounds = array<i64: 16, 128>}, {pipeline_mode = #tpu.pipeline_mode<synchronous>, transform_indices = @transform_5, window_bounds = array<i64: 1, 1>}]} {
    %c0_i32 = arith.constant 0 : i32
    %0 = arith.cmpi eq, %arg0, %c0_i32 : i32
    %1 = arith.extui %0 : i1 to i32
    %c0_i32_0 = arith.constant 0 : i32
    %2 = arith.cmpi ne, %1, %c0_i32_0 : i32
    scf.if %2 {
      %cst_21 = arith.constant 0.000000e+00 : f32
      %37 = vector.broadcast %cst_21 : f32 to vector<16x128xf32>
      %c0_22 = arith.constant 0 : index
      %c0_23 = arith.constant 0 : index
      %38 = vector.load %arg7[%c0_22, %c0_23] : memref<16x128xf32, #tpu.memory_space<vmem>>, vector<16x128xf32>
      tpu.vector_store %arg7[%c0_22, %c0_23], %37 {strides = array<i32>} : memref<16x128xf32, #tpu.memory_space<vmem>>, vector<16x128xf32>,
    } else {
    }
    %c0 = arith.constant 0 : index
    %c0_1 = arith.constant 0 : index
    %3 = vector.load %arg1[%c0, %c0_1] : memref<16x128xf32, #tpu.memory_space<vmem>>, vector<16x128xf32>
    %c0_2 = arith.constant 0 : index
    %c0_3 = arith.constant 0 : index
    %4 = vector.load %arg2[%c0_2, %c0_3] : memref<16x128xf32, #tpu.memory_space<vmem>>, vector<16x128xf32>
    %c0_4 = arith.constant 0 : index
    %c0_5 = arith.constant 0 : index
    %5 = vector.load %arg3[%c0_4, %c0_5] : memref<16x128xf32, #tpu.memory_space<vmem>>, vector<16x128xf32>
    %c0_6 = arith.constant 0 : index
    %c0_7 = arith.constant 0 : index
    %6 = vector.load %arg4[%c0_6, %c0_7] : memref<16x128xf32, #tpu.memory_space<vmem>>, vector<16x128xf32>
    %c0_8 = arith.constant 0 : index
    %c0_9 = arith.constant 0 : index
    %7 = vector.load %arg5[%c0_8, %c0_9] : memref<16x128xf32, #tpu.memory_space<vmem>>, vector<16x128xf32>
    %8 = arith.mulf %3, %3 : vector<16x128xf32>
    %9 = arith.mulf %4, %4 : vector<16x128xf32>
    %10 = arith.mulf %3, %4 : vector<16x128xf32>
    %11 = arith.subf %5, %8 : vector<16x128xf32>
    %12 = arith.subf %6, %9 : vector<16x128xf32>
    %13 = arith.subf %7, %10 : vector<16x128xf32>
    %cst = arith.constant 2.000000e+00 : f32
    %14 = vector.broadcast %cst : f32 to vector<16x128xf32>
    %15 = arith.mulf %14, %10 : vector<16x128xf32>
    %cst_10 = arith.constant 9.99999974E-5 : f32
    %16 = vector.broadcast %cst_10 : f32 to vector<16x128xf32>
    %17 = arith.addf %15, %16 : vector<16x128xf32>
    %cst_11 = arith.constant 2.000000e+00 : f32
    %18 = vector.broadcast %cst_11 : f32 to vector<16x128xf32>
    %19 = arith.mulf %18, %13 : vector<16x128xf32>
    %cst_12 = arith.constant 8.99999984E-4 : f32
    %20 = vector.broadcast %cst_12 : f32 to vector<16x128xf32>
    %21 = arith.addf %19, %20 : vector<16x128xf32>
    %22 = arith.mulf %17, %21 : vector<16x128xf32>
    %23 = arith.addf %8, %9 : vector<16x128xf32>
    %cst_13 = arith.constant 9.99999974E-5 : f32
    %24 = vector.broadcast %cst_13 : f32 to vector<16x128xf32>
    %25 = arith.addf %23, %24 : vector<16x128xf32>
    %26 = arith.addf %11, %12 : vector<16x128xf32>
    %cst_14 = arith.constant 8.99999984E-4 : f32
    %27 = vector.broadcast %cst_14 : f32 to vector<16x128xf32>
    %28 = arith.addf %26, %27 : vector<16x128xf32>
    %29 = arith.mulf %25, %28 : vector<16x128xf32>
    %30 = arith.divf %22, %29 : vector<16x128xf32>
    %c0_15 = arith.constant 0 : index
    %c0_16 = arith.constant 0 : index
    %31 = vector.load %arg7[%c0_15, %c0_16] : memref<16x128xf32, #tpu.memory_space<vmem>>, vector<16x128xf32>
    %32 = arith.addf %31, %30 : vector<16x128xf32>
    %c0_17 = arith.constant 0 : index
    %c0_18 = arith.constant 0 : index
    %33 = vector.load %arg7[%c0_17, %c0_18] : memref<16x128xf32, #tpu.memory_space<vmem>>, vector<16x128xf32>
    tpu.vector_store %arg7[%c0_17, %c0_18], %32 {strides = array<i32>} : memref<16x128xf32, #tpu.memory_space<vmem>>, vector<16x128xf32>,
    %c0_i32_19 = arith.constant 0 : i32
    %34 = arith.cmpi eq, %arg0, %c0_i32_19 : i32
    %35 = arith.extui %34 : i1 to i32
    %c0_i32_20 = arith.constant 0 : i32
    %36 = arith.cmpi ne, %35, %c0_i32_20 : i32
    scf.if %36 {
      %c0_21 = arith.constant 0 : index
      %c0_22 = arith.constant 0 : index
      %37 = vector.load %arg7[%c0_21, %c0_22] : memref<16x128xf32, #tpu.memory_space<vmem>>, vector<16x128xf32>
      %cst_23 = arith.constant dense<0.000000e+00> : vector<128xf32>
      %38 = vector.multi_reduction <add>, %37, %cst_23 [0] : vector<16x128xf32> to vector<128xf32>
      %39 = vector.shape_cast %38 : vector<128xf32> to vector<1x128xf32>
      %cst_24 = arith.constant dense<0.000000e+00> : vector<1xf32>
      %40 = vector.multi_reduction <add>, %39, %cst_24 [1] : vector<1x128xf32> to vector<1xf32>
      %41 = vector.shape_cast %40 : vector<1xf32> to vector<1x1xf32>
      %cst_25 = arith.constant 4.8828125E-4 : f32
      %42 = vector.broadcast %cst_25 : f32 to vector<1x1xf32>
      %43 = arith.mulf %41, %42 : vector<1x1xf32>
      %c0_26 = arith.constant 0 : index
      %c0_27 = arith.constant 0 : index
      %44 = vector.load %arg6[%c0_26, %c0_27] : memref<1x1xf32, #tpu.memory_space<vmem>>, vector<1x1xf32>
      tpu.vector_store %arg6[%c0_26, %c0_27], %43 {strides = array<i32>} : memref<1x1xf32, #tpu.memory_space<vmem>>, vector<1x1xf32>,
    } else {
    }
    return
  }
  func.func @transform_0(%arg0: i32) -> (i32, i32) {
    %c0_i32 = arith.constant 0 : i32
    %c0_i32_0 = arith.constant 0 : i32
    return %arg0, %c0_i32 : i32, i32
  }
  func.func @transform_1(%arg0: i32) -> (i32, i32) {
    %c0_i32 = arith.constant 0 : i32
    %c0_i32_0 = arith.constant 0 : i32
    return %arg0, %c0_i32 : i32, i32
  }
  func.func @transform_2(%arg0: i32) -> (i32, i32) {
    %c0_i32 = arith.constant 0 : i32
    %c0_i32_0 = arith.constant 0 : i32
    return %arg0, %c0_i32 : i32, i32
  }
  func.func @transform_3(%arg0: i32) -> (i32, i32) {
    %c0_i32 = arith.constant 0 : i32
    %c0_i32_0 = arith.constant 0 : i32
    return %arg0, %c0_i32 : i32, i32
  }
  func.func @transform_4(%arg0: i32) -> (i32, i32) {
    %c0_i32 = arith.constant 0 : i32
    %c0_i32_0 = arith.constant 0 : i32
    return %arg0, %c0_i32 : i32, i32
  }
  func.func @transform_5(%arg0: i32) -> (i32, i32) {
    %c0_i32 = arith.constant 0 : i32
    %c0_i32_0 = arith.constant 0 : i32
    %c0_i32_1 = arith.constant 0 : i32
    return %c0_i32, %c0_i32_0 : i32, i32
  }
}

module attributes {stable_mosaic.version = 11 : i64} {
  func.func @_mean_kernel(%arg0: i32, %arg1: memref<16x128xf32, #tpu.memory_space<vmem>>, %arg2: memref<16x128xf32, #tpu.memory_space<vmem>>, %arg3: memref<1x1xf32, #tpu.memory_space<vmem>>, %arg4: memref<16x128xf32, #tpu.memory_space<vmem>>) attributes {dimension_semantics = [#tpu.dimension_semantics<arbitrary>], iteration_bounds = array<i64: 1>, scalar_prefetch = 0 : i64, scratch_operands = 1 : i64, tpu.core_type = #tpu.core_type<tc>, window_params = [{transform_indices = @transform_0, window_bounds = array<i64: 16, 128>}, {transform_indices = @transform_1, window_bounds = array<i64: 16, 128>}, {pipeline_mode = #tpu.pipeline_mode<synchronous>, transform_indices = @transform_2, window_bounds = array<i64: 1, 1>}]} {
    %c0_i32 = arith.constant 0 : i32
    %0 = arith.cmpi eq, %arg0, %c0_i32 : i32
    %1 = arith.extui %0 : i1 to i32
    %c0_i32_0 = arith.constant 0 : i32
    %2 = arith.cmpi ne, %1, %c0_i32_0 : i32
    scf.if %2 {
      %cst_11 = arith.constant 0.000000e+00 : f32
      %19 = vector.broadcast %cst_11 : f32 to vector<16x128xf32>
      %c0_12 = arith.constant 0 : index
      %c0_13 = arith.constant 0 : index
      %20 = vector.load %arg4[%c0_12, %c0_13] : memref<16x128xf32, #tpu.memory_space<vmem>>, vector<16x128xf32>
      tpu.vector_store %arg4[%c0_12, %c0_13], %19 {strides = array<i32>} : memref<16x128xf32, #tpu.memory_space<vmem>>, vector<16x128xf32>,
    } else {
    }
    %c0 = arith.constant 0 : index
    %c0_1 = arith.constant 0 : index
    %3 = vector.load %arg1[%c0, %c0_1] : memref<16x128xf32, #tpu.memory_space<vmem>>, vector<16x128xf32>
    %c0_2 = arith.constant 0 : index
    %c0_3 = arith.constant 0 : index
    %4 = vector.load %arg2[%c0_2, %c0_3] : memref<16x128xf32, #tpu.memory_space<vmem>>, vector<16x128xf32>
    %5 = arith.subf %3, %4 : vector<16x128xf32>
    %6 = math.absf %5 : vector<16x128xf32>
    %cst = arith.constant 1.000000e+00 : f32
    %7 = vector.broadcast %cst : f32 to vector<16x128xf32>
    %8 = arith.mulf %7, %6 : vector<16x128xf32>
    %9 = arith.mulf %5, %5 : vector<16x128xf32>
    %cst_4 = arith.constant 0.000000e+00 : f32
    %10 = vector.broadcast %cst_4 : f32 to vector<16x128xf32>
    %11 = arith.mulf %10, %9 : vector<16x128xf32>
    %12 = arith.addf %8, %11 : vector<16x128xf32>
    %c0_5 = arith.constant 0 : index
    %c0_6 = arith.constant 0 : index
    %13 = vector.load %arg4[%c0_5, %c0_6] : memref<16x128xf32, #tpu.memory_space<vmem>>, vector<16x128xf32>
    %14 = arith.addf %13, %12 : vector<16x128xf32>
    %c0_7 = arith.constant 0 : index
    %c0_8 = arith.constant 0 : index
    %15 = vector.load %arg4[%c0_7, %c0_8] : memref<16x128xf32, #tpu.memory_space<vmem>>, vector<16x128xf32>
    tpu.vector_store %arg4[%c0_7, %c0_8], %14 {strides = array<i32>} : memref<16x128xf32, #tpu.memory_space<vmem>>, vector<16x128xf32>,
    %c0_i32_9 = arith.constant 0 : i32
    %16 = arith.cmpi eq, %arg0, %c0_i32_9 : i32
    %17 = arith.extui %16 : i1 to i32
    %c0_i32_10 = arith.constant 0 : i32
    %18 = arith.cmpi ne, %17, %c0_i32_10 : i32
    scf.if %18 {
      %c0_11 = arith.constant 0 : index
      %c0_12 = arith.constant 0 : index
      %19 = vector.load %arg4[%c0_11, %c0_12] : memref<16x128xf32, #tpu.memory_space<vmem>>, vector<16x128xf32>
      %cst_13 = arith.constant dense<0.000000e+00> : vector<128xf32>
      %20 = vector.multi_reduction <add>, %19, %cst_13 [0] : vector<16x128xf32> to vector<128xf32>
      %21 = vector.shape_cast %20 : vector<128xf32> to vector<1x128xf32>
      %cst_14 = arith.constant dense<0.000000e+00> : vector<1xf32>
      %22 = vector.multi_reduction <add>, %21, %cst_14 [1] : vector<1x128xf32> to vector<1xf32>
      %23 = vector.shape_cast %22 : vector<1xf32> to vector<1x1xf32>
      %cst_15 = arith.constant 4.8828125E-4 : f32
      %24 = vector.broadcast %cst_15 : f32 to vector<1x1xf32>
      %25 = arith.mulf %23, %24 : vector<1x1xf32>
      %c0_16 = arith.constant 0 : index
      %c0_17 = arith.constant 0 : index
      %26 = vector.load %arg3[%c0_16, %c0_17] : memref<1x1xf32, #tpu.memory_space<vmem>>, vector<1x1xf32>
      tpu.vector_store %arg3[%c0_16, %c0_17], %25 {strides = array<i32>} : memref<1x1xf32, #tpu.memory_space<vmem>>, vector<1x1xf32>,
    } else {
    }
    return
  }
  func.func @transform_0(%arg0: i32) -> (i32, i32) {
    %c0_i32 = arith.constant 0 : i32
    %c0_i32_0 = arith.constant 0 : i32
    return %arg0, %c0_i32 : i32, i32
  }
  func.func @transform_1(%arg0: i32) -> (i32, i32) {
    %c0_i32 = arith.constant 0 : i32
    %c0_i32_0 = arith.constant 0 : i32
    return %arg0, %c0_i32 : i32, i32
  }
  func.func @transform_2(%arg0: i32) -> (i32, i32) {
    %c0_i32 = arith.constant 0 : i32
    %c0_i32_0 = arith.constant 0 : i32
    %c0_i32_1 = arith.constant 0 : i32
    return %c0_i32, %c0_i32_0 : i32, i32
  }
}

</mosaic_0001>

<llo_original>
// kernel: loss_function.3
$region0: #{loss_function.3}
  #allocation0 [shape = 'u32[]', space=smem, size = 0x4, offset = 0x4, fixed_abs, tag = 'smem constant byte address 0x4 - core index']
  #allocation1 [shape = 'u32[144,128]{1,0:T(1,128)}', space=vmem, size = 0x12000, scoped, tag = 'internal scratch']
  #allocation2 [shape = 'f32[16,128]{1,0:T(8,128)}', space=vmem, size = 0x2000, scoped, tag = 'scratch operand']
  %s0 = inlined_call_operand.vmem [shape: f32[16,128], index: 0, kind: input, shape index: {}]
  %s1 = inlined_call_operand.vmem [shape: f32[16,128], index: 1, kind: input, shape index: {}]
  %s2 = inlined_call_operand.hbm [shape: f32[1,1], index: 2, kind: output, shape index: {}]
  %s3 = sld [smem:[#allocation0]]
  $region26: #{loss_function.3} parent=0
    _
  %s5 = ssub.s32 1, %s3
  %s6 = scalar_select 0, %s5, %s3
  $region1: #{loss_function.3} parent=0
    #allocation3 [shape = 'u8[512]{0}', space=vmem, size = 0x400, scoped, tag = 'output window, operand 0, single buffered']
    #allocation4 [shape = 's32[1]{0}', space=sflag, size = 0x4, scoped, tag = 'scoped memory for loss_function.3']
    %7 = vsyncpa [#allocation4], 0
    // Predicated region
    $region2: #{loss_function.3} parent=1 // pred_check
      _
    $region3: #{loss_function.3} parent=1 // pred_check_branch
      %9 = sbr.rel (0) target = $region5
    $region4: #{loss_function.3} parent=1 // pred_region
      _
    $region5: #{loss_function.3} parent=1 // pred_fallthru
      _
    // Predicated region
    $region6: #{loss_function.3} parent=1 // pred_check
      _
    $region7: #{loss_function.3} parent=1 // pred_check_branch
      %11 = sbr.rel (0) target = $region9
    $region8: #{loss_function.3} parent=1 // pred_region
      _
    $region9: #{loss_function.3} parent=1 // pred_fallthru
      _
    %p12 = scmp.eq.s32.totalorder 0, 0
    // Predicated region
    $region10: #{loss_function.3} parent=1 // pred_check
      %p13 = pneg %p12
    $region11: #{loss_function.3} parent=1 // pred_check_branch
      %15 = sbr.rel (%p13) target = $region13
    $region12: #{loss_function.3} parent=1 // pred_region
      %16 = vst [vmem:[#allocation2] sm:$0xff] 0.0
      %17 = vst [vmem:[#allocation2 + $0x8] sm:$0xff] 0.0
    $region13: #{loss_function.3} parent=1 // pred_fallthru
      _
    %v18 = vld [vmem:[%s0] sm:$0xff]
    %v19 = vld [vmem:[%s0 + $0x8] sm:$0xff]
    %v20 = vld [vmem:[%s1] sm:$0xff]
    %v21 = vld [vmem:[%s1 + $0x8] sm:$0xff]
    %v22 = vsub.f32 %v18, %v20
    %v23 = vsub.f32 %v19, %v21
    %v24 = vand.u32 2147483647, %v22
    %v25 = vand.u32 2147483647, %v23
    %v26 = vmul.f32 %v24, 0.8
    %v27 = vmul.f32 %v25, 0.8
    %v28 = vmul.f32 %v22, %v22
    %v29 = vmul.f32 %v23, %v23
    %v30 = vmul.f32 %v28, 0.2
    %v31 = vmul.f32 %v29, 0.2
    %v32 = vadd.f32 %v26, %v30
    %v33 = vadd.f32 %v27, %v31
    %v34 = vld [vmem:[#allocation2] sm:$0xff]
    %v35 = vld [vmem:[#allocation2 + $0x8] sm:$0xff]
    %v36 = vadd.f32 %v34, %v32
    %v37 = vadd.f32 %v35, %v33
    %38 = vst [vmem:[#allocation2] sm:$0xff] %v36
    %39 = vst [vmem:[#allocation2 + $0x8] sm:$0xff] %v37
    // Predicated region
    $region14: #{loss_function.3} parent=1 // pred_check
      %p40 = pneg %p12
    $region15: #{loss_function.3} parent=1 // pred_check_branch
      %42 = sbr.rel (%p40) target = $region17
    $region16: #{loss_function.3} parent=1 // pred_region
      %v43 = vld [vmem:[#allocation2] sm:$0xff]
      %v44 = vld [vmem:[#allocation2 + $0x8] sm:$0xff]
      %v45 = vadd.f32 %v43, %v44
      %v46 = vrot.slane %v45, 4
      %v47 = vadd.f32 %v45, %v46
      %v48 = vrot.slane %v47, 2
      %v49 = vadd.f32 %v47, %v48
      %v50 = vrot.slane %v49, 1
      %v51 = vadd.f32 %v49, %v50
      %52 = vadd.xlane.f32.xlu0 %v51
      %v53 = vpop.xlane.xlu0 %52
      %v54 = vmul.f32 %v53, 0.00048828125
      %vm55 = vcmask 0
      %56 = vst.msk [vmem:[#allocation3] sm:$0x1] %vm55, %v54
    $region17: #{loss_function.3} parent=1 // pred_fallthru
      _
    // Predicated region
    $region18: #{loss_function.3} parent=1 // pred_check
      _
    $region19: #{loss_function.3} parent=1 // pred_check_branch
      %58 = sbr.rel (0) target = $region21
    $region20: #{loss_function.3} parent=1 // pred_region
      %s60 = ssub.s32 16, 16
      %61 = vsyncadd [#allocation4], %s60
      %s63 = sshll.u32 [#allocation3], 4
      %s64 = int_to_ptr.vmem [resolvable:$true] %s63
      %66 = dma.vmem_to_hbm [thread:$0]  %s64, 16, %s2, [#allocation4]
    $region21: #{loss_function.3} parent=1 // pred_fallthru
      _
    // Predicated region
    $region22: #{loss_function.3} parent=1 // pred_check
      _
    $region23: #{loss_function.3} parent=1 // pred_check_branch
      %68 = sbr.rel (0) target = $region25
    $region24: #{loss_function.3} parent=1 // pred_region
      %69 = dma.done [#allocation4], 16
    $region25: #{loss_function.3} parent=1 // pred_fallthru
      _
    %70 = vsyncpa [#allocation4], 1

// kernel: loss_function.4
$region0: #{loss_function.4}
  #allocation0 [shape = 'u32[]', space=smem, size = 0x4, offset = 0x4, fixed_abs, tag = 'smem constant byte address 0x4 - core index']
  #allocation1 [shape = 'u32[144,128]{1,0:T(1,128)}', space=vmem, size = 0x12000, scoped, tag = 'internal scratch']
  #allocation2 [shape = 'f32[16,128]{1,0:T(8,128)}', space=vmem, size = 0x2000, scoped, tag = 'scratch operand']
  %s0 = inlined_call_operand.vmem [shape: f32[16,128], index: 0, kind: input, shape index: {}]
  %s1 = inlined_call_operand.vmem [shape: f32[16,128], index: 1, kind: input, shape index: {}]
  %s2 = inlined_call_operand.vmem [shape: f32[16,128], index: 2, kind: input, shape index: {}]
  %s3 = inlined_call_operand.vmem [shape: f32[16,128], index: 3, kind: input, shape index: {}]
  %s4 = inlined_call_operand.vmem [shape: f32[16,128], index: 4, kind: input, shape index: {}]
  %s5 = inlined_call_operand.hbm [shape: f32[1,1], index: 5, kind: output, shape index: {}]
  %s6 = sld [smem:[#allocation0]]
  $region38: #{loss_function.4} parent=0
    _
  %s8 = ssub.s32 1, %s6
  %s9 = scalar_select 0, %s8, %s6
  $region1: #{loss_function.4} parent=0
    #allocation3 [shape = 'u8[512]{0}', space=vmem, size = 0x400, scoped, tag = 'output window, operand 0, single buffered']
    #allocation4 [shape = 's32[1]{0}', space=sflag, size = 0x4, scoped, tag = 'scoped memory for loss_function.4']
    %10 = vsyncpa [#allocation4], 0
    // Predicated region
    $region2: #{loss_function.4} parent=1 // pred_check
      _
    $region3: #{loss_function.4} parent=1 // pred_check_branch
      %12 = sbr.rel (0) target = $region5
    $region4: #{loss_function.4} parent=1 // pred_region
      _
    $region5: #{loss_function.4} parent=1 // pred_fallthru
      _
    // Predicated region
    $region6: #{loss_function.4} parent=1 // pred_check
      _
    $region7: #{loss_function.4} parent=1 // pred_check_branch
      %14 = sbr.rel (0) target = $region9
    $region8: #{loss_function.4} parent=1 // pred_region
      _
    $region9: #{loss_function.4} parent=1 // pred_fallthru
      _
    // Predicated region
    $region10: #{loss_function.4} parent=1 // pred_check
      _
    $region11: #{loss_function.4} parent=1 // pred_check_branch
      %16 = sbr.rel (0) target = $region13
    $region12: #{loss_function.4} parent=1 // pred_region
      _
    $region13: #{loss_function.4} parent=1 // pred_fallthru
      _
    // Predicated region
    $region14: #{loss_function.4} parent=1 // pred_check
      _
    $region15: #{loss_function.4} parent=1 // pred_check_branch
      %18 = sbr.rel (0) target = $region17
    $region16: #{loss_function.4} parent=1 // pred_region
      _
    $region17: #{loss_function.4} parent=1 // pred_fallthru
      _
    // Predicated region
    $region18: #{loss_function.4} parent=1 // pred_check
      _
    $region19: #{loss_function.4} parent=1 // pred_check_branch
      %20 = sbr.rel (0) target = $region21
    $region20: #{loss_function.4} parent=1 // pred_region
      _
    $region21: #{loss_function.4} parent=1 // pred_fallthru
      _
    %p21 = scmp.eq.s32.totalorder 0, 0
    // Predicated region
    $region22: #{loss_function.4} parent=1 // pred_check
      %p22 = pneg %p21
    $region23: #{loss_function.4} parent=1 // pred_check_branch
      %24 = sbr.rel (%p22) target = $region25
    $region24: #{loss_function.4} parent=1 // pred_region
      %25 = vst [vmem:[#allocation2] sm:$0xff] 0.0
      %26 = vst [vmem:[#allocation2 + $0x8] sm:$0xff] 0.0
    $region25: #{loss_function.4} parent=1 // pred_fallthru
      _
    %v27 = vld [vmem:[%s0] sm:$0xff]
    %v28 = vld [vmem:[%s0 + $0x8] sm:$0xff]
    %v29 = vld [vmem:[%s1] sm:$0xff]
    %v30 = vld [vmem:[%s1 + $0x8] sm:$0xff]
    %v31 = vld [vmem:[%s2] sm:$0xff]
    %v32 = vld [vmem:[%s2 + $0x8] sm:$0xff]
    %v33 = vld [vmem:[%s3] sm:$0xff]
    %v34 = vld [vmem:[%s3 + $0x8] sm:$0xff]
    %v35 = vld [vmem:[%s4] sm:$0xff]
    %v36 = vld [vmem:[%s4 + $0x8] sm:$0xff]
    %v37 = vmul.f32 %v27, %v27
    %v38 = vmul.f32 %v28, %v28
    %v39 = vmul.f32 %v29, %v29
    %v40 = vmul.f32 %v30, %v30
    %v41 = vmul.f32 %v27, %v29
    %v42 = vmul.f32 %v28, %v30
    %v43 = vsub.f32 %v31, %v37
    %v44 = vsub.f32 %v32, %v38
    %v45 = vsub.f32 %v33, %v39
    %v46 = vsub.f32 %v34, %v40
    %v47 = vsub.f32 %v35, %v41
    %v48 = vsub.f32 %v36, %v42
    %v49 = vmul.f32 %v41, 2.0
    %v50 = vmul.f32 %v42, 2.0
    %v51 = vadd.f32 %v49, 0.0001
    %v52 = vadd.f32 %v50, 0.0001
    %v53 = vmul.f32 %v47, 2.0
    %v54 = vmul.f32 %v48, 2.0
    %v55 = vadd.f32 %v53, 0.0009
    %v56 = vadd.f32 %v54, 0.0009
    %v57 = vmul.f32 %v51, %v55
    %v58 = vmul.f32 %v52, %v56
    %v59 = vadd.f32 %v37, %v39
    %v60 = vadd.f32 %v38, %v40
    %v61 = vadd.f32 %v59, 0.0001
    %v62 = vadd.f32 %v60, 0.0001
    %v63 = vadd.f32 %v43, %v45
    %v64 = vadd.f32 %v44, %v46
    %v65 = vadd.f32 %v63, 0.0009
    %v66 = vadd.f32 %v64, 0.0009
    %v67 = vmul.f32 %v61, %v65
    %v68 = vmul.f32 %v62, %v66
    %v69 = vrcp.pop %v67
    %v70 = vmul.f32 %v57, %v69
    %v71 = vrcp.pop %v68
    %v72 = vmul.f32 %v58, %v71
    %v73 = vld [vmem:[#allocation2] sm:$0xff]
    %v74 = vld [vmem:[#allocation2 + $0x8] sm:$0xff]
    %v75 = vadd.f32 %v73, %v70
    %v76 = vadd.f32 %v74, %v72
    %77 = vst [vmem:[#allocation2] sm:$0xff] %v75
    %78 = vst [vmem:[#allocation2 + $0x8] sm:$0xff] %v76
    // Predicated region
    $region26: #{loss_function.4} parent=1 // pred_check
      %p79 = pneg %p21
    $region27: #{loss_function.4} parent=1 // pred_check_branch
      %81 = sbr.rel (%p79) target = $region29
    $region28: #{loss_function.4} parent=1 // pred_region
      %v82 = vld [vmem:[#allocation2] sm:$0xff]
      %v83 = vld [vmem:[#allocation2 + $0x8] sm:$0xff]
      %v84 = vadd.f32 %v82, %v83
      %v85 = vrot.slane %v84, 4
      %v86 = vadd.f32 %v84, %v85
      %v87 = vrot.slane %v86, 2
      %v88 = vadd.f32 %v86, %v87
      %v89 = vrot.slane %v88, 1
      %v90 = vadd.f32 %v88, %v89
      %91 = vadd.xlane.f32.xlu0 %v90
      %v92 = vpop.xlane.xlu0 %91
      %v93 = vmul.f32 %v92, 0.00048828125
      %vm94 = vcmask 0
      %95 = vst.msk [vmem:[#allocation3] sm:$0x1] %vm94, %v93
    $region29: #{loss_function.4} parent=1 // pred_fallthru
      _
    // Predicated region
    $region30: #{loss_function.4} parent=1 // pred_check
      _
    $region31: #{loss_function.4} parent=1 // pred_check_branch
      %97 = sbr.rel (0) target = $region33
    $region32: #{loss_function.4} parent=1 // pred_region
      %s99 = ssub.s32 16, 16
      %100 = vsyncadd [#allocation4], %s99
      %s102 = sshll.u32 [#allocation3], 4
      %s103 = int_to_ptr.vmem [resolvable:$true] %s102
      %105 = dma.vmem_to_hbm [thread:$0]  %s103, 16, %s5, [#allocation4]
    $region33: #{loss_function.4} parent=1 // pred_fallthru
      _
    // Predicated region
    $region34: #{loss_function.4} parent=1 // pred_check
      _
    $region35: #{loss_function.4} parent=1 // pred_check_branch
      %107 = sbr.rel (0) target = $region37
    $region36: #{loss_function.4} parent=1 // pred_region
      %108 = dma.done [#allocation4], 16
    $region37: #{loss_function.4} parent=1 // pred_fallthru
      _
    %109 = vsyncpa [#allocation4], 1

// kernel: loss_function.5
$region0: #{loss_function.5}
  #allocation0 [shape = 'u32[]', space=smem, size = 0x4, offset = 0x4, fixed_abs, tag = 'smem constant byte address 0x4 - core index']
  #allocation1 [shape = 'u32[144,128]{1,0:T(1,128)}', space=vmem, size = 0x12000, scoped, tag = 'internal scratch']
  #allocation2 [shape = 'f32[16,128]{1,0:T(8,128)}', space=vmem, size = 0x2000, scoped, tag = 'scratch operand']
  %s0 = inlined_call_operand.vmem [shape: f32[16,128], index: 0, kind: input, shape index: {}]
  %s1 = inlined_call_operand.vmem [shape: f32[16,128], index: 1, kind: input, shape index: {}]
  %s2 = inlined_call_operand.hbm [shape: f32[1,1], index: 2, kind: output, shape index: {}]
  %s3 = sld [smem:[#allocation0]]
  $region26: #{loss_function.5} parent=0
    _
  %s5 = ssub.s32 1, %s3
  %s6 = scalar_select 0, %s5, %s3
  $region1: #{loss_function.5} parent=0
    #allocation3 [shape = 'u8[512]{0}', space=vmem, size = 0x400, scoped, tag = 'output window, operand 0, single buffered']
    #allocation4 [shape = 's32[1]{0}', space=sflag, size = 0x4, scoped, tag = 'scoped memory for loss_function.5']
    %7 = vsyncpa [#allocation4], 0
    // Predicated region
    $region2: #{loss_function.5} parent=1 // pred_check
      _
    $region3: #{loss_function.5} parent=1 // pred_check_branch
      %9 = sbr.rel (0) target = $region5
    $region4: #{loss_function.5} parent=1 // pred_region
      _
    $region5: #{loss_function.5} parent=1 // pred_fallthru
      _
    // Predicated region
    $region6: #{loss_function.5} parent=1 // pred_check
      _
    $region7: #{loss_function.5} parent=1 // pred_check_branch
      %11 = sbr.rel (0) target = $region9
    $region8: #{loss_function.5} parent=1 // pred_region
      _
    $region9: #{loss_function.5} parent=1 // pred_fallthru
      _
    %p12 = scmp.eq.s32.totalorder 0, 0
    // Predicated region
    $region10: #{loss_function.5} parent=1 // pred_check
      %p13 = pneg %p12
    $region11: #{loss_function.5} parent=1 // pred_check_branch
      %15 = sbr.rel (%p13) target = $region13
    $region12: #{loss_function.5} parent=1 // pred_region
      %16 = vst [vmem:[#allocation2] sm:$0xff] 0.0
      %17 = vst [vmem:[#allocation2 + $0x8] sm:$0xff] 0.0
    $region13: #{loss_function.5} parent=1 // pred_fallthru
      _
    %v18 = vld [vmem:[%s0] sm:$0xff]
    %v19 = vld [vmem:[%s0 + $0x8] sm:$0xff]
    %v20 = vld [vmem:[%s1] sm:$0xff]
    %v21 = vld [vmem:[%s1 + $0x8] sm:$0xff]
    %v22 = vsub.f32 %v18, %v20
    %v23 = vsub.f32 %v19, %v21
    %v24 = vand.u32 2147483647, %v22
    %v25 = vand.u32 2147483647, %v23
    %v26 = vmul.f32 %v22, %v22
    %v27 = vmul.f32 %v23, %v23
    %v28 = vmul.f32 %v26, 0.0
    %v29 = vmul.f32 %v27, 0.0
    %v30 = vadd.f32 %v24, %v28
    %v31 = vadd.f32 %v25, %v29
    %v32 = vld [vmem:[#allocation2] sm:$0xff]
    %v33 = vld [vmem:[#allocation2 + $0x8] sm:$0xff]
    %v34 = vadd.f32 %v32, %v30
    %v35 = vadd.f32 %v33, %v31
    %36 = vst [vmem:[#allocation2] sm:$0xff] %v34
    %37 = vst [vmem:[#allocation2 + $0x8] sm:$0xff] %v35
    // Predicated region
    $region14: #{loss_function.5} parent=1 // pred_check
      %p38 = pneg %p12
    $region15: #{loss_function.5} parent=1 // pred_check_branch
      %40 = sbr.rel (%p38) target = $region17
    $region16: #{loss_function.5} parent=1 // pred_region
      %v41 = vld [vmem:[#allocation2] sm:$0xff]
      %v42 = vld [vmem:[#allocation2 + $0x8] sm:$0xff]
      %v43 = vadd.f32 %v41, %v42
      %v44 = vrot.slane %v43, 4
      %v45 = vadd.f32 %v43, %v44
      %v46 = vrot.slane %v45, 2
      %v47 = vadd.f32 %v45, %v46
      %v48 = vrot.slane %v47, 1
      %v49 = vadd.f32 %v47, %v48
      %50 = vadd.xlane.f32.xlu0 %v49
      %v51 = vpop.xlane.xlu0 %50
      %v52 = vmul.f32 %v51, 0.00048828125
      %vm53 = vcmask 0
      %54 = vst.msk [vmem:[#allocation3] sm:$0x1] %vm53, %v52
    $region17: #{loss_function.5} parent=1 // pred_fallthru
      _
    // Predicated region
    $region18: #{loss_function.5} parent=1 // pred_check
      _
    $region19: #{loss_function.5} parent=1 // pred_check_branch
      %56 = sbr.rel (0) target = $region21
    $region20: #{loss_function.5} parent=1 // pred_region
      %s58 = ssub.s32 16, 16
      %59 = vsyncadd [#allocation4], %s58
      %s61 = sshll.u32 [#allocation3], 4
      %s62 = int_to_ptr.vmem [resolvable:$true] %s61
      %64 = dma.vmem_to_hbm [thread:$0]  %s62, 16, %s2, [#allocation4]
    $region21: #{loss_function.5} parent=1 // pred_fallthru
      _
    // Predicated region
    $region22: #{loss_function.5} parent=1 // pred_check
      _
    $region23: #{loss_function.5} parent=1 // pred_check_branch
      %66 = sbr.rel (0) target = $region25
    $region24: #{loss_function.5} parent=1 // pred_region
      %67 = dma.done [#allocation4], 16
    $region25: #{loss_function.5} parent=1 // pred_fallthru
      _
    %68 = vsyncpa [#allocation4], 1

</llo_original>
